<compile_context>
chip_gen: v7x
topology: tpu7x:2x2x1
jax: 0.10.0
libtpu: 0.0.40
codegen_flags: <defaults>
</compile_context>

<pallas_src>
import functools

import jax
import jax.numpy as jnp
from jax.experimental import pallas as pl
from jax.experimental.pallas import tpu as pltpu

F = 128    # lane width: every feature dim is zero-padded to this
SUB = 8    # sublane rows reserved per stacked block (x1 | x2 | state)


def make_policy_kernel(B, data_size, state_size, action_size):
    d, s, a = data_size, state_size, action_size
    inv_B = 1.0 / B          # Python float -> literal constant, not a tracer

    def policy_kernel(x_ref, w_ref, b_ref, out_ref):
        # x_ref : (3*SUB, F) bf16  rows [0,SUB)=x1, [SUB,2SUB)=x2, [2SUB,3SUB)=state
        # w_ref : (4, F, F)  bf16  block-diag fused MLP layers 0..2, action head 3
        # b_ref : (4, F)     f32   fused biases
        # out_ref: (1, F)    f32   batch-mean action probabilities (lane padded)
        bb = b_ref[...]                                      # (4, F)

        # --- fused data+state MLP (block-diagonal), one pass over all rows ---
        h = jnp.dot(x_ref[...], w_ref[0], preferred_element_type=jnp.float32)
        h = jnp.maximum(h + bb[0:1], 0.0)
        h = jnp.dot(h.astype(jnp.bfloat16), w_ref[1],
                    preferred_element_type=jnp.float32)
        h = jnp.maximum(h + bb[1:2], 0.0)
        y = jnp.dot(h.astype(jnp.bfloat16), w_ref[2],
                    preferred_element_type=jnp.float32)
        y = y + bb[2:3]                                      # (3*SUB, F)

        # --- action head: ONE matmul ---
        # Layer 3 already routed x1-outputs to lanes [0,d), x2-outputs to
        # [d,2d) and state-outputs to [2d,2d+s).  Keep, per row block, only
        # its own lane band (drops the cross-block bias garbage), contract
        # against the single packed aW tile, then recombine the three
        # sublane blocks (same batch row in each block).
        row = jax.lax.broadcasted_iota(jnp.int32, y.shape, 0)
        lane = jax.lax.broadcasted_iota(jnp.int32, y.shape, 1)
        keep = (((row < SUB) & (lane < d))
                | ((row >= SUB) & (row < 2 * SUB) & (lane >= d) & (lane < 2 * d))
                | ((row >= 2 * SUB) & (lane >= 2 * d) & (lane < 2 * d + s)))
        z = jnp.dot(jnp.where(keep, y, 0.0).astype(jnp.bfloat16), w_ref[3],
                    preferred_element_type=jnp.float32)      # (3*SUB, F)
        logits = z[0:SUB] + z[SUB:2 * SUB] + z[2 * SUB:3 * SUB] + bb[3:4]

        # Mask padded action lanes so they contribute exactly 0 after softmax.
        alane = jax.lax.broadcasted_iota(jnp.int32, logits.shape, 1)
        logits = jnp.where(alane < a, logits, -1e30)

        # Numerically stable softmax; EUP approx reciprocal + 1 Newton step.
        m = jnp.max(logits, axis=-1, keepdims=True)
        e = jnp.exp(logits - m)
        denom = jnp.sum(e, axis=-1, keepdims=True)
        r = pl.reciprocal(denom, approx=True)
        r = r * (2.0 - denom * r)                            # Newton refinement
        probs = e * r                                        # (SUB, F)

        # Batch mean over the real rows only (rows >= B are padding).
        arow = jax.lax.broadcasted_iota(jnp.int32, probs.shape, 0)
        probs = jnp.where(arow < B, probs, 0.0)
        out_ref[...] = jnp.sum(probs, axis=0, keepdims=True) * inv_B

    return policy_kernel


def make_params(key, state_size, data_size, action_size):
    """Weights stored as (in_features, out_features); biases as (1, out)."""
    d2 = data_size ** 2
    s2 = state_size * 2
    dims = [
        (data_size, d2), (d2,), (d2, d2), (d2,), (d2, data_size), (data_size,),
        (state_size, s2), (s2,), (s2, s2), (s2,), (s2, state_size), (state_size,),
        (state_size + 2 * data_size, action_size), (action_size,),
    ]
    keys = jax.random.split(key, len(dims))
    params = []
    for k, shp in zip(keys, dims):
        if len(shp) == 1:
            params.append(0.05 * jax.random.normal(k, (1, shp[0]), jnp.float32))
        else:
            params.append(jax.random.normal(k, shp, jnp.float32) / jnp.sqrt(shp[0]))
    return params


def pack_params(params, state_size, data_size, action_size):
    """Pack the 14 parameter tensors into one bf16 weight buffer (4, F, F) and
    one f32 bias buffer (4, F), block-diagonal fused layout."""
    (dW1, db1, dW2, db2, dW3, db3,
     sW1, sb1, sW2, sb2, sW3, sb3, aW, ab) = params
    d, s, a = data_size, state_size, action_size
    d2, s2 = d * d, 2 * s
    off = d2                               # lane offset of the state block
    assert off + max(s2, s) <= F and 2 * d + s <= F and a <= F and d <= off

    def tile():
        return jnp.zeros((F, F), jnp.float32)

    w0 = tile().at[0:d, 0:d2].set(dW1).at[off:off + s, off:off + s2].set(sW1)
    w1 = tile().at[0:d2, 0:d2].set(dW2).at[off:off + s2, off:off + s2].set(sW2)
    # Layer 3 routes: x1 -> lanes [0,d), x2 -> lanes [d,2d) (duplicate dW3
    # columns, zero extra bytes), state -> lanes [2d,2d+s).  This makes the
    # action head a single matmul against the original aW (rows [x1|x2|state]).
    w2 = (tile().at[0:d2, 0:d].set(dW3)
                .at[0:d2, d:2 * d].set(dW3)
                .at[off:off + s2, 2 * d:2 * d + s].set(sW3))
    w3 = tile().at[0:2 * d + s, 0:a].set(aW)
    W_packed = jnp.stack([w0, w1, w2, w3]).astype(jnp.bfloat16)   # (4, F, F)

    def brow(pairs):
        r = jnp.zeros((F,), jnp.float32)
        for o, v in pairs:
            v = v.reshape(-1)
            r = r.at[o:o + v.shape[0]].set(v)
        return r

    b_packed = jnp.stack([
        brow([(0, db1), (off, sb1)]),
        brow([(0, db2), (off, sb2)]),
        brow([(0, db3), (d, db3), (2 * d, sb3)]),
        brow([(0, ab)]),
    ])                                                            # (4, F) f32
    return W_packed, b_packed


@functools.partial(jax.jit, static_argnames=("action_size",))
def policy_forward(state, x1, x2, W_packed, b_packed, *, action_size):
    """Forward pass of PolicyNetwork; returns the batch-mean action probs."""
    B, state_size = state.shape
    data_size = x1.shape[1]
    assert B <= SUB and x2.shape == x1.shape
    off = data_size * data_size            # lane offset of the state block

    # One stacked, lane-padded bf16 activation buffer -> single input DMA.
    x_all = jnp.zeros((3 * SUB, F), jnp.bfloat16)
    x_all = x_all.at[0:B, 0:data_size].set(x1.astype(jnp.bfloat16))
    x_all = x_all.at[SUB:SUB + B, 0:data_size].set(x2.astype(jnp.bfloat16))
    x_all = x_all.at[2 * SUB:2 * SUB + B, off:off + state_size].set(
        state.astype(jnp.bfloat16))

    vmem = pl.BlockSpec(memory_space=pltpu.MemorySpace.VMEM)
    out = pl.pallas_call(
        make_policy_kernel(B, data_size, state_size, action_size),
        out_shape=jax.ShapeDtypeStruct((1, F), jnp.float32),
        in_specs=[vmem, vmem, vmem],
        out_specs=vmem,
    )(x_all, W_packed, b_packed)
    return out[0, :action_size]                                   # (action,)


def policy_forward_ref(state, x1, x2, params):
    """Pure-JAX reference matching the torch module, with the same bf16
    weight/activation rounding the kernel uses (f32 accumulation)."""
    (dW1, db1, dW2, db2, dW3, db3,
     sW1, sb1, sW2, sb2, sW3, sb3, aW, ab) = params

    def bf(x):
        return x.astype(jnp.bfloat16)

    def lin(x, W, b):
        return jnp.dot(bf(x), bf(W), preferred_element_type=jnp.float32) + b

    def mlp3(x, W1, b1, W2, b2, W3, b3):
        h = jnp.maximum(lin(x, W1, b1), 0.0)
        h = jnp.maximum(lin(h, W2, b2), 0.0)
        return lin(h, W3, b3)

    y1 = mlp3(x1, dW1, db1, dW2, db2, dW3, db3)
    y2 = mlp3(x2, dW1, db1, dW2, db2, dW3, db3)
    ys = mlp3(state, sW1, sb1, sW2, sb2, sW3, sb3)
    logits = lin(jnp.concatenate([y1, y2, ys], axis=1), aW, ab)
    return jax.nn.softmax(logits, axis=-1).mean(axis=0)


if __name__ == "__main__":
    batch = 2
    state_size = 8
    data_size = 8        # data-MLP hidden = data_size**2 = 64
    action_size = 4

    key = jax.random.PRNGKey(0)
    kp, ks, k1, k2 = jax.random.split(key, 4)

    params = make_params(kp, state_size, data_size, action_size)
    state = jax.random.normal(ks, (batch, state_size), jnp.float32)
    x1 = jax.random.normal(k1, (batch, data_size), jnp.float32)
    x2 = jax.random.normal(k2, (batch, data_size), jnp.float32)

    W_packed, b_packed = pack_params(params, state_size, data_size, action_size)

    out = policy_forward(state, x1, x2, W_packed, b_packed,
                         action_size=action_size)
    out = jax.block_until_ready(out)

    ref = policy_forward_ref(state, x1, x2, params)
    assert out.shape == (action_size,)
    assert jnp.allclose(out, ref, atol=1e-3, rtol=1e-3), (out, ref)
    assert jnp.allclose(jnp.sum(out), 1.0, atol=1e-3)

    print("KERNEL_OK")
</pallas_src>

<mosaic_0001>
module attributes {stable_mosaic.version = 11 : i64} {
  func.func @policy_kernel(%arg0: memref<24x128xbf16, #tpu.memory_space<vmem>>, %arg1: memref<4x128x128xbf16, #tpu.memory_space<vmem>>, %arg2: memref<4x128xf32, #tpu.memory_space<vmem>>, %arg3: memref<1x128xf32, #tpu.memory_space<vmem>>) attributes {dimension_semantics = [], scalar_prefetch = 0 : i64, scratch_operands = 0 : i64, tpu.core_type = #tpu.core_type<tc>} {
    %c0 = arith.constant 0 : index
    %c0_0 = arith.constant 0 : index
    %0 = vector.load %arg2[%c0, %c0_0] : memref<4x128xf32, #tpu.memory_space<vmem>>, vector<4x128xf32>
    %c0_1 = arith.constant 0 : index
    %c0_2 = arith.constant 0 : index
    %1 = vector.load %arg0[%c0_1, %c0_2] : memref<24x128xbf16, #tpu.memory_space<vmem>>, vector<24x128xbf16>
    %c0_3 = arith.constant 0 : index
    %c0_4 = arith.constant 0 : index
    %c0_5 = arith.constant 0 : index
    %2 = vector.load %arg1[%c0_3, %c0_4, %c0_5] : memref<4x128x128xbf16, #tpu.memory_space<vmem>>, vector<1x128x128xbf16>
    %3 = vector.shape_cast %2 : vector<1x128x128xbf16> to vector<128x128xbf16>
    %cst = arith.constant dense<0.000000e+00> : vector<24x128xf32>
    %4 = tpu.matmul %1, %3, %cst {dimension_numbers = #tpu.dot_dimension_numbers<[1], [0], [0], [1], [0, 0, 1, 1], [], []>} : vector<24x128xbf16>, vector<128x128xbf16>, vector<24x128xf32> -> vector<24x128xf32>
    %5 = vector.extract_strided_slice %0 {offsets = [0, 0], sizes = [1, 128], strides = [1, 1]} : vector<4x128xf32> to vector<1x128xf32>
    %6 = vector.broadcast %5 : vector<1x128xf32> to vector<24x128xf32>
    %7 = arith.addf %4, %6 : vector<24x128xf32>
    %cst_6 = arith.constant 0.000000e+00 : f32
    %8 = vector.broadcast %cst_6 : f32 to vector<24x128xf32>
    %9 = arith.maximumf %7, %8 : vector<24x128xf32>
    %10 = arith.truncf %9 : vector<24x128xf32> to vector<24x128xbf16>
    %c1 = arith.constant 1 : index
    %c0_7 = arith.constant 0 : index
    %c0_8 = arith.constant 0 : index
    %11 = vector.load %arg1[%c1, %c0_7, %c0_8] : memref<4x128x128xbf16, #tpu.memory_space<vmem>>, vector<1x128x128xbf16>
    %12 = vector.shape_cast %11 : vector<1x128x128xbf16> to vector<128x128xbf16>
    %cst_9 = arith.constant dense<0.000000e+00> : vector<24x128xf32>
    %13 = tpu.matmul %10, %12, %cst_9 {dimension_numbers = #tpu.dot_dimension_numbers<[1], [0], [0], [1], [0, 0, 1, 1], [], []>} : vector<24x128xbf16>, vector<128x128xbf16>, vector<24x128xf32> -> vector<24x128xf32>
    %14 = vector.extract_strided_slice %0 {offsets = [1, 0], sizes = [1, 128], strides = [1, 1]} : vector<4x128xf32> to vector<1x128xf32>
    %15 = vector.broadcast %14 : vector<1x128xf32> to vector<24x128xf32>
    %16 = arith.addf %13, %15 : vector<24x128xf32>
    %cst_10 = arith.constant 0.000000e+00 : f32
    %17 = vector.broadcast %cst_10 : f32 to vector<24x128xf32>
    %18 = arith.maximumf %16, %17 : vector<24x128xf32>
    %19 = arith.truncf %18 : vector<24x128xf32> to vector<24x128xbf16>
    %c2 = arith.constant 2 : index
    %c0_11 = arith.constant 0 : index
    %c0_12 = arith.constant 0 : index
    %20 = vector.load %arg1[%c2, %c0_11, %c0_12] : memref<4x128x128xbf16, #tpu.memory_space<vmem>>, vector<1x128x128xbf16>
    %21 = vector.shape_cast %20 : vector<1x128x128xbf16> to vector<128x128xbf16>
    %cst_13 = arith.constant dense<0.000000e+00> : vector<24x128xf32>
    %22 = tpu.matmul %19, %21, %cst_13 {dimension_numbers = #tpu.dot_dimension_numbers<[1], [0], [0], [1], [0, 0, 1, 1], [], []>} : vector<24x128xbf16>, vector<128x128xbf16>, vector<24x128xf32> -> vector<24x128xf32>
    %23 = vector.extract_strided_slice %0 {offsets = [2, 0], sizes = [1, 128], strides = [1, 1]} : vector<4x128xf32> to vector<1x128xf32>
    %24 = vector.broadcast %23 : vector<1x128xf32> to vector<24x128xf32>
    %25 = arith.addf %22, %24 : vector<24x128xf32>
    %26 = tpu.iota {dimensions = array<i32: 0>} : vector<24x128xi32>
    %27 = tpu.iota {dimensions = array<i32: 1>} : vector<24x128xi32>
    %c8_i32 = arith.constant 8 : i32
    %28 = vector.broadcast %c8_i32 : i32 to vector<24x128xi32>
    %29 = arith.cmpi slt, %26, %28 : vector<24x128xi32>
    %c8_i32_14 = arith.constant 8 : i32
    %30 = vector.broadcast %c8_i32_14 : i32 to vector<24x128xi32>
    %31 = arith.cmpi slt, %27, %30 : vector<24x128xi32>
    %32 = arith.andi %29, %31 : vector<24x128xi1>
    %c8_i32_15 = arith.constant 8 : i32
    %33 = vector.broadcast %c8_i32_15 : i32 to vector<24x128xi32>
    %34 = arith.cmpi sge, %26, %33 : vector<24x128xi32>
    %c16_i32 = arith.constant 16 : i32
    %35 = vector.broadcast %c16_i32 : i32 to vector<24x128xi32>
    %36 = arith.cmpi slt, %26, %35 : vector<24x128xi32>
    %37 = arith.andi %34, %36 : vector<24x128xi1>
    %c8_i32_16 = arith.constant 8 : i32
    %38 = vector.broadcast %c8_i32_16 : i32 to vector<24x128xi32>
    %39 = arith.cmpi sge, %27, %38 : vector<24x128xi32>
    %40 = arith.andi %37, %39 : vector<24x128xi1>
    %c16_i32_17 = arith.constant 16 : i32
    %41 = vector.broadcast %c16_i32_17 : i32 to vector<24x128xi32>
    %42 = arith.cmpi slt, %27, %41 : vector<24x128xi32>
    %43 = arith.andi %40, %42 : vector<24x128xi1>
    %44 = arith.ori %32, %43 : vector<24x128xi1>
    %c16_i32_18 = arith.constant 16 : i32
    %45 = vector.broadcast %c16_i32_18 : i32 to vector<24x128xi32>
    %46 = arith.cmpi sge, %26, %45 : vector<24x128xi32>
    %c16_i32_19 = arith.constant 16 : i32
    %47 = vector.broadcast %c16_i32_19 : i32 to vector<24x128xi32>
    %48 = arith.cmpi sge, %27, %47 : vector<24x128xi32>
    %49 = arith.andi %46, %48 : vector<24x128xi1>
    %c24_i32 = arith.constant 24 : i32
    %50 = vector.broadcast %c24_i32 : i32 to vector<24x128xi32>
    %51 = arith.cmpi slt, %27, %50 : vector<24x128xi32>
    %52 = arith.andi %49, %51 : vector<24x128xi1>
    %53 = arith.ori %44, %52 : vector<24x128xi1>
    %cst_20 = arith.constant 0.000000e+00 : f32
    %54 = vector.broadcast %cst_20 : f32 to vector<24x128xf32>
    %55 = arith.select %53, %25, %54 : vector<24x128xi1>, vector<24x128xf32>
    %56 = arith.truncf %55 : vector<24x128xf32> to vector<24x128xbf16>
    %c3 = arith.constant 3 : index
    %c0_21 = arith.constant 0 : index
    %c0_22 = arith.constant 0 : index
    %57 = vector.load %arg1[%c3, %c0_21, %c0_22] : memref<4x128x128xbf16, #tpu.memory_space<vmem>>, vector<1x128x128xbf16>
    %58 = vector.shape_cast %57 : vector<1x128x128xbf16> to vector<128x128xbf16>
    %cst_23 = arith.constant dense<0.000000e+00> : vector<24x128xf32>
    %59 = tpu.matmul %56, %58, %cst_23 {dimension_numbers = #tpu.dot_dimension_numbers<[1], [0], [0], [1], [0, 0, 1, 1], [], []>} : vector<24x128xbf16>, vector<128x128xbf16>, vector<24x128xf32> -> vector<24x128xf32>
    %60 = vector.extract_strided_slice %59 {offsets = [0, 0], sizes = [8, 128], strides = [1, 1]} : vector<24x128xf32> to vector<8x128xf32>
    %61 = vector.extract_strided_slice %59 {offsets = [8, 0], sizes = [8, 128], strides = [1, 1]} : vector<24x128xf32> to vector<8x128xf32>
    %62 = arith.addf %60, %61 : vector<8x128xf32>
    %63 = vector.extract_strided_slice %59 {offsets = [16, 0], sizes = [8, 128], strides = [1, 1]} : vector<24x128xf32> to vector<8x128xf32>
    %64 = arith.addf %62, %63 : vector<8x128xf32>
    %65 = vector.extract_strided_slice %0 {offsets = [3, 0], sizes = [1, 128], strides = [1, 1]} : vector<4x128xf32> to vector<1x128xf32>
    %66 = vector.broadcast %65 : vector<1x128xf32> to vector<8x128xf32>
    %67 = arith.addf %64, %66 : vector<8x128xf32>
    %68 = tpu.iota {dimensions = array<i32: 1>} : vector<8x128xi32>
    %c4_i32 = arith.constant 4 : i32
    %69 = vector.broadcast %c4_i32 : i32 to vector<8x128xi32>
    %70 = arith.cmpi slt, %68, %69 : vector<8x128xi32>
    %cst_24 = arith.constant -1.000000e+30 : f32
    %71 = vector.broadcast %cst_24 : f32 to vector<8x128xf32>
    %72 = arith.select %70, %67, %71 : vector<8x128xi1>, vector<8x128xf32>
    %cst_25 = arith.constant dense<0xFF800000> : vector<8xf32>
    %73 = vector.multi_reduction <maximumf>, %72, %cst_25 [1] : vector<8x128xf32> to vector<8xf32>
    %74 = vector.shape_cast %73 : vector<8xf32> to vector<8x1xf32>
    %75 = vector.broadcast %74 : vector<8x1xf32> to vector<8x128xf32>
    %76 = arith.subf %72, %75 : vector<8x128xf32>
    %77 = math.exp %76 : vector<8x128xf32>
    %cst_26 = arith.constant dense<0.000000e+00> : vector<8xf32>
    %78 = vector.multi_reduction <add>, %77, %cst_26 [1] : vector<8x128xf32> to vector<8xf32>
    %79 = vector.shape_cast %78 : vector<8xf32> to vector<8x1xf32>
    %80 = tpu.reciprocal %79 {approx = true} : vector<8x1xf32> -> vector<8x1xf32>
    %81 = arith.mulf %79, %80 : vector<8x1xf32>
    %cst_27 = arith.constant 2.000000e+00 : f32
    %82 = vector.broadcast %cst_27 : f32 to vector<8x1xf32>
    %83 = arith.subf %82, %81 : vector<8x1xf32>
    %84 = arith.mulf %80, %83 : vector<8x1xf32>
    %85 = vector.broadcast %84 : vector<8x1xf32> to vector<8x128xf32>
    %86 = arith.mulf %77, %85 : vector<8x128xf32>
    %87 = tpu.iota {dimensions = array<i32: 0>} : vector<8x128xi32>
    %c2_i32 = arith.constant 2 : i32
    %88 = vector.broadcast %c2_i32 : i32 to vector<8x128xi32>
    %89 = arith.cmpi slt, %87, %88 : vector<8x128xi32>
    %cst_28 = arith.constant 0.000000e+00 : f32
    %90 = vector.broadcast %cst_28 : f32 to vector<8x128xf32>
    %91 = arith.select %89, %86, %90 : vector<8x128xi1>, vector<8x128xf32>
    %cst_29 = arith.constant dense<0.000000e+00> : vector<128xf32>
    %92 = vector.multi_reduction <add>, %91, %cst_29 [0] : vector<8x128xf32> to vector<128xf32>
    %93 = vector.shape_cast %92 : vector<128xf32> to vector<1x128xf32>
    %cst_30 = arith.constant 5.000000e-01 : f32
    %94 = vector.broadcast %cst_30 : f32 to vector<1x128xf32>
    %95 = arith.mulf %93, %94 : vector<1x128xf32>
    %c0_31 = arith.constant 0 : index
    %c0_32 = arith.constant 0 : index
    %96 = vector.load %arg3[%c0_31, %c0_32] : memref<1x128xf32, #tpu.memory_space<vmem>>, vector<1x128xf32>
    tpu.vector_store %arg3[%c0_31, %c0_32], %95 {strides = array<i32>} : memref<1x128xf32, #tpu.memory_space<vmem>>, vector<1x128xf32>,
    return
  }
}

</mosaic_0001>

<llo_original>
// kernel: policy_forward.1
$region0: #{policy_forward.1}
  #allocation0 [shape = 'u32[]', space=smem, size = 0x4, offset = 0x4, fixed_abs, tag = 'smem constant byte address 0x4 - core index']
  #allocation1 [shape = 'u32[144,128]{1,0:T(1,128)}', space=vmem, size = 0x12000, scoped, tag = 'internal scratch']
  %s0 = inlined_call_operand.vmem [shape: bf16[24,128], index: 0, kind: input, shape index: {}]
  %s1 = inlined_call_operand.hbm [shape: bf16[4,128,128], index: 1, kind: input, shape index: {}]
  %s2 = inlined_call_operand.vmem [shape: f32[4,128], index: 2, kind: input, shape index: {}]
  %s3 = inlined_call_operand.vmem [shape: f32[1,128], index: 3, kind: output, shape index: {}]
  %s4 = sld [smem:[#allocation0]]
  $region26: #{policy_forward.1} parent=0
    _
  %s6 = ssub.s32 1, %s4
  %s7 = scalar_select 0, %s6, %s4
  $region1: #{policy_forward.1} parent=0
    #allocation2 [shape = 'u8[131072]{0}', space=vmem, size = 0x20000, scoped, tag = 'input window, operand 1, single buffered']
    #allocation3 [shape = 's32[1]{0}', space=sflag, size = 0x4, scoped, tag = 'scoped memory for policy_forward.1']
    %8 = vsyncpa [#allocation3], 0
    // Predicated region
    $region2: #{policy_forward.1} parent=1 // pred_check
      _
    $region3: #{policy_forward.1} parent=1 // pred_check_branch
      %10 = sbr.rel (0) target = $region5
    $region4: #{policy_forward.1} parent=1 // pred_region
      _
    $region5: #{policy_forward.1} parent=1 // pred_fallthru
      _
    // Predicated region
    $region6: #{policy_forward.1} parent=1 // pred_check
      _
    $region7: #{policy_forward.1} parent=1 // pred_check_branch
      %12 = sbr.rel (0) target = $region9
    $region8: #{policy_forward.1} parent=1 // pred_region
      %s14 = ssub.s32 4096, 4096
      %15 = vsyncadd [#allocation3], %s14
      %s16 = sshll.u32 [#allocation2], 4
      %s17 = int_to_ptr.vmem [resolvable:$true] %s16
      %22 = dma.hbm_to_vmem [thread:$0]  %s1, 4096, %s17, [#allocation3], 64, 64, 4
    $region9: #{policy_forward.1} parent=1 // pred_fallthru
      _
    // Predicated region
    $region10: #{policy_forward.1} parent=1 // pred_check
      _
    $region11: #{policy_forward.1} parent=1 // pred_check_branch
      %24 = sbr.rel (0) target = $region13
    $region12: #{policy_forward.1} parent=1 // pred_region
      _
    $region13: #{policy_forward.1} parent=1 // pred_fallthru
      _
    // Predicated region
    $region14: #{policy_forward.1} parent=1 // pred_check
      _
    $region15: #{policy_forward.1} parent=1 // pred_check_branch
      %26 = sbr.rel (0) target = $region17
    $region16: #{policy_forward.1} parent=1 // pred_region
      %27 = dma.done [#allocation3], 4096
    $region17: #{policy_forward.1} parent=1 // pred_fallthru
      _
    %v29 = vld [vmem:[%s2] sm:$0xf]
    %v30 = vld [vmem:[%s0] sm:$0xf]
    %v31 = vld [vmem:[%s0 + $0x4] sm:$0xf]
    %v32 = vld [vmem:[%s0 + $0x8] sm:$0xf]
    %v33 = vld [vmem:[#allocation2] sm:$0xf]
    %v34 = vld [vmem:[#allocation2 + $0x4] sm:$0xf]
    %v35 = vld [vmem:[#allocation2 + $0x8] sm:$0xf]
    %v36 = vld [vmem:[#allocation2 + $0xc] sm:$0xf]
    %v37 = vld [vmem:[#allocation2 + $0x10] sm:$0xf]
    %v38 = vld [vmem:[#allocation2 + $0x14] sm:$0xf]
    %v39 = vld [vmem:[#allocation2 + $0x18] sm:$0xf]
    %v40 = vld [vmem:[#allocation2 + $0x1c] sm:$0xf]
    %v41 = vld [vmem:[#allocation2 + $0x20] sm:$0xf]
    %v42 = vld [vmem:[#allocation2 + $0x24] sm:$0xf]
    %v43 = vld [vmem:[#allocation2 + $0x28] sm:$0xf]
    %v44 = vld [vmem:[#allocation2 + $0x2c] sm:$0xf]
    %v45 = vld [vmem:[#allocation2 + $0x30] sm:$0xf]
    %v46 = vld [vmem:[#allocation2 + $0x34] sm:$0xf]
    %v47 = vld [vmem:[#allocation2 + $0x38] sm:$0xf]
    %v48 = vld [vmem:[#allocation2 + $0x3c] sm:$0xf]
    %v49 = vlaneseq
    %v50 = vshrl.u32 %v49, 7
    %v51 = vsub.s32 0, %v50
    %v52 = vrot.slane %v29, %v51
    %v56 = vunpack.c.l.b16 %v30
    %v57 = vunpack.c.l.b16 %v31
    %v58 = vunpack.c.l.b16 %v32
    %v59 = vpack.c.b16 %v57, %v56
    %v60 = vpack.c.b16 %v58, %v58
    %v79 = vunpack.c.l.b16 %v33
    %v80 = vunpack.c.l.b16 %v34
    %v81 = vunpack.c.l.b16 %v35
    %v82 = vunpack.c.l.b16 %v36
    %v83 = vunpack.c.l.b16 %v37
    %v84 = vunpack.c.l.b16 %v38
    %v85 = vunpack.c.l.b16 %v39
    %v86 = vunpack.c.l.b16 %v40
    %v87 = vunpack.c.l.b16 %v41
    %v88 = vunpack.c.l.b16 %v42
    %v89 = vunpack.c.l.b16 %v43
    %v90 = vunpack.c.l.b16 %v44
    %v91 = vunpack.c.l.b16 %v45
    %v92 = vunpack.c.l.b16 %v46
    %v93 = vunpack.c.l.b16 %v47
    %v94 = vunpack.c.l.b16 %v48
    %v95 = vpack.c.b16 %v80, %v79
    %v96 = vpack.c.b16 %v82, %v81
    %v97 = vpack.c.b16 %v84, %v83
    %v98 = vpack.c.b16 %v86, %v85
    %v99 = vpack.c.b16 %v88, %v87
    %v100 = vpack.c.b16 %v90, %v89
    %v101 = vpack.c.b16 %v92, %v91
    %v102 = vpack.c.b16 %v94, %v93
    %111 = vmatprep.subr.bf16.mxu0 0
    %112 = vmatpush1.bf16.msra.mxu0 %v95
    %113 = vmatprep.subr.bf16.mxu0 0
    %114 = vmatpush1.bf16.msra.mxu0 %v96
    %115 = vmatprep.subr.bf16.mxu0 0
    %116 = vmatpush1.bf16.msra.mxu0 %v97
    %117 = vmatprep.subr.bf16.mxu0 0
    %118 = vmatpush1.bf16.msra.mxu0 %v98
    %119 = vmatprep.subr.bf16.mxu0 0
    %120 = vmatpush1.bf16.msra.mxu0 %v99
    %121 = vmatprep.subr.bf16.mxu0 0
    %122 = vmatpush1.bf16.msra.mxu0 %v100
    %123 = vmatprep.subr.bf16.mxu0 0
    %124 = vmatpush1.bf16.msra.mxu0 %v101
    %125 = vmatprep.subr.bf16.mxu0 0
    %126 = vmatpush1.bf16.msra.mxu0 %v102
    %127 = vmatprep.subr.bf16.mxu0 0
    %128 = vmatpush1.bf16.msra.mxu0 0
    %129 = vmatprep.subr.bf16.mxu0 0
    %130 = vmatpush1.bf16.msra.mxu0 0
    %131 = vmatprep.subr.bf16.mxu0 0
    %132 = vmatpush1.bf16.msra.mxu0 0
    %133 = vmatprep.subr.bf16.mxu0 0
    %134 = vmatpush1.bf16.msra.mxu0 0
    %135 = vmatprep.subr.bf16.mxu0 0
    %136 = vmatpush1.bf16.msra.mxu0 0
    %137 = vmatprep.subr.bf16.mxu0 0
    %138 = vmatpush1.bf16.msra.mxu0 0
    %139 = vmatprep.subr.bf16.mxu0 0
    %140 = vmatpush1.bf16.msra.mxu0 0
    %141 = vmatprep.subr.bf16.mxu0 0
    %142 = vmatpush1.bf16.msra.mxu0 0
    %143 = vmatprep.mubr.bf16.mxu0 0
    %144 = vmatmul.mubr.bf16.gmra.mrb[0].mxu0 %v59
    %v145 = vpop.f32.mrb[0].mxu0
    %v146 = vadd.f32 %v52, %v145
    %v147 = vpop.f32.mrb[0].mxu0
    %v148 = vpop.f32.mrb[0].mxu0
    %v149 = vadd.f32 %v52, %v148
    %v150 = vpop.f32.mrb[0].mxu0
    %151 = vmatprep.mubr.bf16.mxu0 0
    %152 = vmatmul.mubr.bf16.gmra.mrb[0].mxu0 %v60
    %v153 = vpop.f32.mrb[0].mxu0
    %v154 = vadd.f32 %v52, %v153
    %v155 = vpop.f32.mrb[0].mxu0
    %v156 = vpop.f32.mrb[0].mxu0
    %v157 = vpop.f32.mrb[0].mxu0
    %158 = vdwg.mxu0
    %v159 = vmax.f32 %v146, 0.0
    %v160 = vmax.f32 %v149, 0.0
    %v161 = vmax.f32 %v154, 0.0
    %v162 = vpack.c.bf16 %v160, %v159
    %v163 = vpack.c.bf16 %v161, %v161
    %s164 = scalar_lea.vmem [#allocation2], 64
    %v165 = vld [vmem:[%s164] sm:$0xf]
    %v166 = vld [vmem:[%s164 + $0x4] sm:$0xf]
    %v167 = vld [vmem:[%s164 + $0x8] sm:$0xf]
    %v168 = vld [vmem:[%s164 + $0xc] sm:$0xf]
    %v169 = vld [vmem:[%s164 + $0x10] sm:$0xf]
    %v170 = vld [vmem:[%s164 + $0x14] sm:$0xf]
    %v171 = vld [vmem:[%s164 + $0x18] sm:$0xf]
    %v172 = vld [vmem:[%s164 + $0x1c] sm:$0xf]
    %v173 = vld [vmem:[%s164 + $0x20] sm:$0xf]
    %v174 = vld [vmem:[%s164 + $0x24] sm:$0xf]
    %v175 = vld [vmem:[%s164 + $0x28] sm:$0xf]
    %v176 = vld [vmem:[%s164 + $0x2c] sm:$0xf]
    %v177 = vld [vmem:[%s164 + $0x30] sm:$0xf]
    %v178 = vld [vmem:[%s164 + $0x34] sm:$0xf]
    %v179 = vld [vmem:[%s164 + $0x38] sm:$0xf]
    %v180 = vld [vmem:[%s164 + $0x3c] sm:$0xf]
    %v181 = vlaneseq
    %v182 = vshrl.u32 %v181, 7
    %v183 = vsub.s32 1, %v182
    %v184 = vrot.slane %v29, %v183
    %v201 = vunpack.c.l.b16 %v165
    %v202 = vunpack.c.l.b16 %v166
    %v203 = vunpack.c.l.b16 %v167
    %v204 = vunpack.c.l.b16 %v168
    %v205 = vunpack.c.l.b16 %v169
    %v206 = vunpack.c.l.b16 %v170
    %v207 = vunpack.c.l.b16 %v171
    %v208 = vunpack.c.l.b16 %v172
    %v209 = vunpack.c.l.b16 %v173
    %v210 = vunpack.c.l.b16 %v174
    %v211 = vunpack.c.l.b16 %v175
    %v212 = vunpack.c.l.b16 %v176
    %v213 = vunpack.c.l.b16 %v177
    %v214 = vunpack.c.l.b16 %v178
    %v215 = vunpack.c.l.b16 %v179
    %v216 = vunpack.c.l.b16 %v180
    %v217 = vpack.c.b16 %v202, %v201
    %v218 = vpack.c.b16 %v204, %v203
    %v219 = vpack.c.b16 %v206, %v205
    %v220 = vpack.c.b16 %v208, %v207
    %v221 = vpack.c.b16 %v210, %v209
    %v222 = vpack.c.b16 %v212, %v211
    %v223 = vpack.c.b16 %v214, %v213
    %v224 = vpack.c.b16 %v216, %v215
    %233 = vmatprep.subr.bf16.mxu0 0
    %234 = vmatpush1.bf16.msra.mxu0 %v217
    %235 = vmatprep.subr.bf16.mxu0 0
    %236 = vmatpush1.bf16.msra.mxu0 %v218
    %237 = vmatprep.subr.bf16.mxu0 0
    %238 = vmatpush1.bf16.msra.mxu0 %v219
    %239 = vmatprep.subr.bf16.mxu0 0
    %240 = vmatpush1.bf16.msra.mxu0 %v220
    %241 = vmatprep.subr.bf16.mxu0 0
    %242 = vmatpush1.bf16.msra.mxu0 %v221
    %243 = vmatprep.subr.bf16.mxu0 0
    %244 = vmatpush1.bf16.msra.mxu0 %v222
    %245 = vmatprep.subr.bf16.mxu0 0
    %246 = vmatpush1.bf16.msra.mxu0 %v223
    %247 = vmatprep.subr.bf16.mxu0 0
    %248 = vmatpush1.bf16.msra.mxu0 %v224
    %249 = vmatprep.subr.bf16.mxu0 0
    %250 = vmatpush1.bf16.msra.mxu0 0
    %251 = vmatprep.subr.bf16.mxu0 0
    %252 = vmatpush1.bf16.msra.mxu0 0
    %253 = vmatprep.subr.bf16.mxu0 0
    %254 = vmatpush1.bf16.msra.mxu0 0
    %255 = vmatprep.subr.bf16.mxu0 0
    %256 = vmatpush1.bf16.msra.mxu0 0
    %257 = vmatprep.subr.bf16.mxu0 0
    %258 = vmatpush1.bf16.msra.mxu0 0
    %259 = vmatprep.subr.bf16.mxu0 0
    %260 = vmatpush1.bf16.msra.mxu0 0
    %261 = vmatprep.subr.bf16.mxu0 0
    %262 = vmatpush1.bf16.msra.mxu0 0
    %263 = vmatprep.subr.bf16.mxu0 0
    %264 = vmatpush1.bf16.msra.mxu0 0
    %265 = vmatprep.mubr.bf16.mxu0 0
    %266 = vmatmul.mubr.bf16.gmra.mrb[0].mxu0 %v162
    %v267 = vpop.f32.mrb[0].mxu0
    %v268 = vadd.f32 %v184, %v267
    %v269 = vpop.f32.mrb[0].mxu0
    %v270 = vpop.f32.mrb[0].mxu0
    %v271 = vadd.f32 %v184, %v270
    %v272 = vpop.f32.mrb[0].mxu0
    %273 = vmatprep.mubr.bf16.mxu0 0
    %274 = vmatmul.mubr.bf16.gmra.mrb[0].mxu0 %v163
    %v275 = vpop.f32.mrb[0].mxu0
    %v276 = vadd.f32 %v184, %v275
    %v277 = vpop.f32.mrb[0].mxu0
    %v278 = vpop.f32.mrb[0].mxu0
    %v279 = vpop.f32.mrb[0].mxu0
    %280 = vdwg.mxu0
    %v281 = vmax.f32 %v268, 0.0
    %v282 = vmax.f32 %v271, 0.0
    %v283 = vmax.f32 %v276, 0.0
    %v284 = vpack.c.bf16 %v282, %v281
    %v285 = vpack.c.bf16 %v283, %v283
    %s286 = scalar_lea.vmem [#allocation2], 128
    %v287 = vld [vmem:[%s286] sm:$0xf]
    %v288 = vld [vmem:[%s286 + $0x4] sm:$0xf]
    %v289 = vld [vmem:[%s286 + $0x8] sm:$0xf]
    %v290 = vld [vmem:[%s286 + $0xc] sm:$0xf]
    %v291 = vld [vmem:[%s286 + $0x10] sm:$0xf]
    %v292 = vld [vmem:[%s286 + $0x14] sm:$0xf]
    %v293 = vld [vmem:[%s286 + $0x18] sm:$0xf]
    %v294 = vld [vmem:[%s286 + $0x1c] sm:$0xf]
    %v295 = vld [vmem:[%s286 + $0x20] sm:$0xf]
    %v296 = vld [vmem:[%s286 + $0x24] sm:$0xf]
    %v297 = vld [vmem:[%s286 + $0x28] sm:$0xf]
    %v298 = vld [vmem:[%s286 + $0x2c] sm:$0xf]
    %v299 = vld [vmem:[%s286 + $0x30] sm:$0xf]
    %v300 = vld [vmem:[%s286 + $0x34] sm:$0xf]
    %v301 = vld [vmem:[%s286 + $0x38] sm:$0xf]
    %v302 = vld [vmem:[%s286 + $0x3c] sm:$0xf]
    %v303 = vlaneseq
    %v304 = vshrl.u32 %v303, 7
    %v305 = vsub.s32 2, %v304
    %v306 = vrot.slane %v29, %v305
    %v323 = vunpack.c.l.b16 %v287
    %v324 = vunpack.c.l.b16 %v288
    %v325 = vunpack.c.l.b16 %v289
    %v326 = vunpack.c.l.b16 %v290
    %v327 = vunpack.c.l.b16 %v291
    %v328 = vunpack.c.l.b16 %v292
    %v329 = vunpack.c.l.b16 %v293
    %v330 = vunpack.c.l.b16 %v294
    %v331 = vunpack.c.l.b16 %v295
    %v332 = vunpack.c.l.b16 %v296
    %v333 = vunpack.c.l.b16 %v297
    %v334 = vunpack.c.l.b16 %v298
    %v335 = vunpack.c.l.b16 %v299
    %v336 = vunpack.c.l.b16 %v300
    %v337 = vunpack.c.l.b16 %v301
    %v338 = vunpack.c.l.b16 %v302
    %v339 = vpack.c.b16 %v324, %v323
    %v340 = vpack.c.b16 %v326, %v325
    %v341 = vpack.c.b16 %v328, %v327
    %v342 = vpack.c.b16 %v330, %v329
    %v343 = vpack.c.b16 %v332, %v331
    %v344 = vpack.c.b16 %v334, %v333
    %v345 = vpack.c.b16 %v336, %v335
    %v346 = vpack.c.b16 %v338, %v337
    %355 = vmatprep.subr.bf16.mxu0 0
    %356 = vmatpush1.bf16.msra.mxu0 %v339
    %357 = vmatprep.subr.bf16.mxu0 0
    %358 = vmatpush1.bf16.msra.mxu0 %v340
    %359 = vmatprep.subr.bf16.mxu0 0
    %360 = vmatpush1.bf16.msra.mxu0 %v341
    %361 = vmatprep.subr.bf16.mxu0 0
    %362 = vmatpush1.bf16.msra.mxu0 %v342
    %363 = vmatprep.subr.bf16.mxu0 0
    %364 = vmatpush1.bf16.msra.mxu0 %v343
    %365 = vmatprep.subr.bf16.mxu0 0
    %366 = vmatpush1.bf16.msra.mxu0 %v344
    %367 = vmatprep.subr.bf16.mxu0 0
    %368 = vmatpush1.bf16.msra.mxu0 %v345
    %369 = vmatprep.subr.bf16.mxu0 0
    %370 = vmatpush1.bf16.msra.mxu0 %v346
    %371 = vmatprep.subr.bf16.mxu0 0
    %372 = vmatpush1.bf16.msra.mxu0 0
    %373 = vmatprep.subr.bf16.mxu0 0
    %374 = vmatpush1.bf16.msra.mxu0 0
    %375 = vmatprep.subr.bf16.mxu0 0
    %376 = vmatpush1.bf16.msra.mxu0 0
    %377 = vmatprep.subr.bf16.mxu0 0
    %378 = vmatpush1.bf16.msra.mxu0 0
    %379 = vmatprep.subr.bf16.mxu0 0
    %380 = vmatpush1.bf16.msra.mxu0 0
    %381 = vmatprep.subr.bf16.mxu0 0
    %382 = vmatpush1.bf16.msra.mxu0 0
    %383 = vmatprep.subr.bf16.mxu0 0
    %384 = vmatpush1.bf16.msra.mxu0 0
    %385 = vmatprep.subr.bf16.mxu0 0
    %386 = vmatpush1.bf16.msra.mxu0 0
    %387 = vmatprep.mubr.bf16.mxu0 0
    %388 = vmatmul.mubr.bf16.gmra.mrb[0].mxu0 %v284
    %v389 = vpop.f32.mrb[0].mxu0
    %v390 = vadd.f32 %v306, %v389
    %v391 = vpop.f32.mrb[0].mxu0
    %v392 = vpop.f32.mrb[0].mxu0
    %v393 = vadd.f32 %v306, %v392
    %v394 = vpop.f32.mrb[0].mxu0
    %395 = vmatprep.mubr.bf16.mxu0 0
    %396 = vmatmul.mubr.bf16.gmra.mrb[0].mxu0 %v285
    %v397 = vpop.f32.mrb[0].mxu0
    %v398 = vadd.f32 %v306, %v397
    %v399 = vpop.f32.mrb[0].mxu0
    %v400 = vpop.f32.mrb[0].mxu0
    %v401 = vpop.f32.mrb[0].mxu0
    %402 = vdwg.mxu0
    %v403 = vlaneseq
    %v404 = vshrl.u32 %v403, 7
    %v405 = vadd.s32 %v404, 8
    %v406 = vadd.s32 %v404, 16
    %v407 = vlaneseq
    %v408 = vand.u32 %v407, 127
    %vm409 = vcmp.lt.s32.totalorder %v404, 8
    %vm410 = vcmp.lt.s32.totalorder %v405, 8
    %vm411 = vcmp.lt.s32.totalorder %v406, 8
    %vm412 = vcmp.lt.s32.totalorder %v408, 8
    %vm413 = vmand %vm409, %vm412
    %vm414 = vmand %vm410, %vm412
    %vm415 = vmand %vm411, %vm412
    %vm416 = vcmp.ge.s32.totalorder %v404, 8
    %vm417 = vcmp.ge.s32.totalorder %v405, 8
    %vm418 = vcmp.ge.s32.totalorder %v406, 8
    %vm419 = vcmp.lt.s32.totalorder %v404, 16
    %vm420 = vcmp.lt.s32.totalorder %v405, 16
    %vm421 = vcmp.lt.s32.totalorder %v406, 16
    %vm422 = vmand %vm416, %vm419
    %vm423 = vmand %vm417, %vm420
    %vm424 = vmand %vm418, %vm421
    %vm425 = vcmp.ge.s32.totalorder %v408, 8
    %vm426 = vmand %vm422, %vm425
    %vm427 = vmand %vm423, %vm425
    %vm428 = vmand %vm424, %vm425
    %vm429 = vcmp.lt.s32.totalorder %v408, 16
    %vm430 = vmand %vm426, %vm429
    %vm431 = vmand %vm427, %vm429
    %vm432 = vmand %vm428, %vm429
    %vm433 = vmor %vm413, %vm430
    %vm434 = vmor %vm414, %vm431
    %vm435 = vmor %vm415, %vm432
    %vm436 = vcmp.ge.s32.totalorder %v404, 16
    %vm437 = vcmp.ge.s32.totalorder %v405, 16
    %vm438 = vcmp.ge.s32.totalorder %v406, 16
    %vm439 = vcmp.ge.s32.totalorder %v408, 16
    %vm440 = vmand %vm436, %vm439
    %vm441 = vmand %vm437, %vm439
    %vm442 = vmand %vm438, %vm439
    %vm443 = vcmp.lt.s32.totalorder %v408, 24
    %vm444 = vmand %vm440, %vm443
    %vm445 = vmand %vm441, %vm443
    %vm446 = vmand %vm442, %vm443
    %vm447 = vmor %vm433, %vm444
    %vm448 = vmor %vm434, %vm445
    %vm449 = vmor %vm435, %vm446
    %v450 = vsel %vm447, %v390, 0.0
    %v451 = vsel %vm448, %v393, 0.0
    %v452 = vsel %vm449, %v398, 0.0
    %v453 = vpack.c.bf16 %v451, %v450
    %v454 = vpack.c.bf16 %v452, %v452
    %s455 = scalar_lea.vmem [#allocation2], 192
    %v456 = vld [vmem:[%s455] sm:$0xf]
    %v457 = vld [vmem:[%s455 + $0x4] sm:$0xf]
    %v458 = vld [vmem:[%s455 + $0x8] sm:$0xf]
    %v459 = vld [vmem:[%s455 + $0xc] sm:$0xf]
    %v460 = vld [vmem:[%s455 + $0x10] sm:$0xf]
    %v461 = vld [vmem:[%s455 + $0x14] sm:$0xf]
    %v462 = vld [vmem:[%s455 + $0x18] sm:$0xf]
    %v463 = vld [vmem:[%s455 + $0x1c] sm:$0xf]
    %v464 = vld [vmem:[%s455 + $0x20] sm:$0xf]
    %v465 = vld [vmem:[%s455 + $0x24] sm:$0xf]
    %v466 = vld [vmem:[%s455 + $0x28] sm:$0xf]
    %v467 = vld [vmem:[%s455 + $0x2c] sm:$0xf]
    %v468 = vld [vmem:[%s455 + $0x30] sm:$0xf]
    %v469 = vld [vmem:[%s455 + $0x34] sm:$0xf]
    %v470 = vld [vmem:[%s455 + $0x38] sm:$0xf]
    %v471 = vld [vmem:[%s455 + $0x3c] sm:$0xf]
    %v488 = vunpack.c.l.b16 %v456
    %v489 = vunpack.c.l.b16 %v457
    %v490 = vunpack.c.l.b16 %v458
    %v491 = vunpack.c.l.b16 %v459
    %v492 = vunpack.c.l.b16 %v460
    %v493 = vunpack.c.l.b16 %v461
    %v494 = vunpack.c.l.b16 %v462
    %v495 = vunpack.c.l.b16 %v463
    %v496 = vunpack.c.l.b16 %v464
    %v497 = vunpack.c.l.b16 %v465
    %v498 = vunpack.c.l.b16 %v466
    %v499 = vunpack.c.l.b16 %v467
    %v500 = vunpack.c.l.b16 %v468
    %v501 = vunpack.c.l.b16 %v469
    %v502 = vunpack.c.l.b16 %v470
    %v503 = vunpack.c.l.b16 %v471
    %v504 = vpack.c.b16 %v489, %v488
    %v505 = vpack.c.b16 %v491, %v490
    %v506 = vpack.c.b16 %v493, %v492
    %v507 = vpack.c.b16 %v495, %v494
    %v508 = vpack.c.b16 %v497, %v496
    %v509 = vpack.c.b16 %v499, %v498
    %v510 = vpack.c.b16 %v501, %v500
    %v511 = vpack.c.b16 %v503, %v502
    %520 = vmatprep.subr.bf16.mxu0 0
    %521 = vmatpush1.bf16.msra.mxu0 %v504
    %522 = vmatprep.subr.bf16.mxu0 0
    %523 = vmatpush1.bf16.msra.mxu0 %v505
    %524 = vmatprep.subr.bf16.mxu0 0
    %525 = vmatpush1.bf16.msra.mxu0 %v506
    %526 = vmatprep.subr.bf16.mxu0 0
    %527 = vmatpush1.bf16.msra.mxu0 %v507
    %528 = vmatprep.subr.bf16.mxu0 0
    %529 = vmatpush1.bf16.msra.mxu0 %v508
    %530 = vmatprep.subr.bf16.mxu0 0
    %531 = vmatpush1.bf16.msra.mxu0 %v509
    %532 = vmatprep.subr.bf16.mxu0 0
    %533 = vmatpush1.bf16.msra.mxu0 %v510
    %534 = vmatprep.subr.bf16.mxu0 0
    %535 = vmatpush1.bf16.msra.mxu0 %v511
    %536 = vmatprep.subr.bf16.mxu0 0
    %537 = vmatpush1.bf16.msra.mxu0 0
    %538 = vmatprep.subr.bf16.mxu0 0
    %539 = vmatpush1.bf16.msra.mxu0 0
    %540 = vmatprep.subr.bf16.mxu0 0
    %541 = vmatpush1.bf16.msra.mxu0 0
    %542 = vmatprep.subr.bf16.mxu0 0
    %543 = vmatpush1.bf16.msra.mxu0 0
    %544 = vmatprep.subr.bf16.mxu0 0
    %545 = vmatpush1.bf16.msra.mxu0 0
    %546 = vmatprep.subr.bf16.mxu0 0
    %547 = vmatpush1.bf16.msra.mxu0 0
    %548 = vmatprep.subr.bf16.mxu0 0
    %549 = vmatpush1.bf16.msra.mxu0 0
    %550 = vmatprep.subr.bf16.mxu0 0
    %551 = vmatpush1.bf16.msra.mxu0 0
    %552 = vmatprep.mubr.bf16.mxu0 0
    %553 = vmatmul.mubr.bf16.gmra.mrb[0].mxu0 %v453
    %v554 = vpop.f32.mrb[0].mxu0
    %v555 = vadd.f32 0.0, %v554
    %v556 = vpop.f32.mrb[0].mxu0
    %v557 = vpop.f32.mrb[0].mxu0
    %v558 = vadd.f32 0.0, %v557
    %v559 = vpop.f32.mrb[0].mxu0
    %560 = vmatprep.mubr.bf16.mxu0 0
    %561 = vmatmul.mubr.bf16.gmra.mrb[0].mxu0 %v454
    %v562 = vpop.f32.mrb[0].mxu0
    %v563 = vadd.f32 0.0, %v562
    %v564 = vpop.f32.mrb[0].mxu0
    %v565 = vpop.f32.mrb[0].mxu0
    %v566 = vpop.f32.mrb[0].mxu0
    %567 = vdwg.mxu0
    %v568 = vadd.f32 %v555, %v558
    %v569 = vadd.f32 %v568, %v563
    %v570 = vlaneseq
    %v571 = vshrl.u32 %v570, 7
    %v572 = vsub.s32 3, %v571
    %v573 = vrot.slane %v29, %v572
    %v574 = vadd.f32 %v569, %v573
    %vm575 = vcmp.lt.s32.totalorder %v408, 4
    %v576 = vsel %vm575, %v574, -1e+30
    %577 = vmax.xlane.f32.xlu0 %v576
    %v578 = vpop.xlane.xlu0 %577
    %v579 = vsub.f32 %v576, %v578
    %v580 = vmul.f32 %v579, 1.442695
    %v581 = vpow.pop %v580
    %582 = vadd.xlane.f32.xlu0 %v581
    %v583 = vpop.xlane.xlu0 %582
    %v584 = vrcp.pop %v583
    %v585 = vmul.f32 %v583, %v584
    %v586 = vsub.f32 2.0, %v585
    %v587 = vmul.f32 %v584, %v586
    %v588 = vmul.f32 %v581, %v587
    %vm589 = vcmp.lt.s32.totalorder %v404, 2
    %v590 = vsel %vm589, %v588, 0.0
    %v591 = vrot.slane %v590, 4
    %v592 = vadd.f32 %v590, %v591
    %v593 = vrot.slane %v592, 2
    %v594 = vadd.f32 %v592, %v593
    %v595 = vrot.slane %v594, 1
    %v596 = vadd.f32 %v594, %v595
    %v597 = vmul.f32 %v596, 0.5
    %598 = vst [vmem:[%s3] sm:$0x1] %v597
    // Predicated region
    $region18: #{policy_forward.1} parent=1 // pred_check
      _
    $region19: #{policy_forward.1} parent=1 // pred_check_branch
      %600 = sbr.rel (0) target = $region21
    $region20: #{policy_forward.1} parent=1 // pred_region
      _
    $region21: #{policy_forward.1} parent=1 // pred_fallthru
      _
    // Predicated region
    $region22: #{policy_forward.1} parent=1 // pred_check
      _
    $region23: #{policy_forward.1} parent=1 // pred_check_branch
      %602 = sbr.rel (0) target = $region25
    $region24: #{policy_forward.1} parent=1 // pred_region
      _
    $region25: #{policy_forward.1} parent=1 // pred_fallthru
      _
    %603 = vsyncpa [#allocation3], 1

</llo_original>
